<compile_context>
chip_gen: v6e
topology: v6e:2x2x1
jax: 0.10.0
libtpu: 0.0.40
codegen_flags: <defaults>
</compile_context>

<pallas_src>
import jax
import jax.numpy as jnp
from jax.experimental import pallas as pl
from jax.experimental.pallas import tpu as pltpu


def _round_up(x, m):
    return (x + m - 1) // m * m


# ---------------------------------------------------------------------------
# Kernel 1: per-node feature transform + attention + source-degree scaling.
# ---------------------------------------------------------------------------
def _transform_kernel(gamma_ref, feat_ref, wm_ref, wv_ref, dos_ref, doi_ref,
                      mm_ref, mv_ref):
    gamma = gamma_ref[0, 0]
    feat = feat_ref[...]
    mean = jnp.maximum(
        jnp.dot(feat, wm_ref[...], preferred_element_type=jnp.float32), 0.0)
    var = jnp.maximum(
        jnp.dot(feat, wv_ref[...], preferred_element_type=jnp.float32), 0.0)
    att = jnp.exp(-gamma * var)                      # EUP transcendental
    mm_ref[...] = mean * att * dos_ref[...]          # * d_out^-1/2
    mv_ref[...] = var * (att * att) * doi_ref[...]   # * d_out^-1


# ---------------------------------------------------------------------------
# Kernel 2: tiled aggregation  out[v] = scale_in(v) * sum_u AT[v,u] * msg[u].
# Grid = (v tiles, u tiles); u is the reduction axis (accumulator pattern).
# ---------------------------------------------------------------------------
def _aggregate_kernel(at_ref, mm_ref, mv_ref, dis_ref, di_ref,
                      om_ref, ov_ref, accm_ref, accv_ref):
    u = pl.program_id(1)

    @pl.when(u == 0)
    def _():
        accm_ref[...] = jnp.zeros_like(accm_ref)
        accv_ref[...] = jnp.zeros_like(accv_ref)

    at = at_ref[...]
    accm_ref[...] += jnp.dot(at, mm_ref[...],
                             preferred_element_type=jnp.float32)
    accv_ref[...] += jnp.dot(at, mv_ref[...],
                             preferred_element_type=jnp.float32)

    @pl.when(u == pl.num_programs(1) - 1)
    def _():
        om_ref[...] = accm_ref[...] * dis_ref[...]   # * d_in^-1/2
        ov_ref[...] = accv_ref[...] * di_ref[...]    # * d_in^-1


def robust_conv(feat, w_mean, w_var, adj, *, gamma=1.0, add_self_loop=True,
                tile_n=256):
    n, in_feats = feat.shape
    out_feats = w_mean.shape[1]

    # --- host-side (XLA) preprocessing: self loops, degrees, transpose, pad ---
    a = adj.astype(jnp.float32)
    if add_self_loop:
        a = a + jnp.eye(n, dtype=jnp.float32)

    deg_out = jnp.maximum(jnp.sum(a, axis=1), 1.0)   # (N,)
    deg_in = jnp.maximum(jnp.sum(a, axis=0), 1.0)    # (N,)

    npad = _round_up(n, tile_n)
    fpad = _round_up(out_feats, 128)

    feat_p = jnp.zeros((npad, in_feats), jnp.float32).at[:n].set(feat)
    wm_p = jnp.zeros((in_feats, fpad), jnp.float32).at[:, :out_feats].set(w_mean)
    wv_p = jnp.zeros((in_feats, fpad), jnp.float32).at[:, :out_feats].set(w_var)
    at_p = jnp.zeros((npad, npad), jnp.float32).at[:n, :n].set(a.T)

    def _pad_col(v):  # (N,) -> (npad, 1), padded entries = 1.0 (harmless)
        return jnp.ones((npad, 1), jnp.float32).at[:n, 0].set(v)

    dout_inv_sqrt = _pad_col(deg_out ** -0.5)
    dout_inv = _pad_col(1.0 / deg_out)
    din_inv_sqrt = _pad_col(deg_in ** -0.5)
    din_inv = _pad_col(1.0 / deg_in)

    gamma_arr = jnp.full((1, 1), gamma, dtype=jnp.float32)

    # --- kernel 1: feature transform, tiled over node rows -------------------
    msg_mean, msg_var = pl.pallas_call(
        _transform_kernel,
        out_shape=(jax.ShapeDtypeStruct((npad, fpad), jnp.float32),
                   jax.ShapeDtypeStruct((npad, fpad), jnp.float32)),
        grid=(npad // tile_n,),
        in_specs=[
            pl.BlockSpec(memory_space=pltpu.MemorySpace.SMEM),    # gamma scalar
            pl.BlockSpec((tile_n, in_feats), lambda i: (i, 0)),   # feat tile
            pl.BlockSpec((in_feats, fpad), lambda i: (0, 0)),     # W_mean
            pl.BlockSpec((in_feats, fpad), lambda i: (0, 0)),     # W_var
            pl.BlockSpec((tile_n, 1), lambda i: (i, 0)),          # d_out^-1/2
            pl.BlockSpec((tile_n, 1), lambda i: (i, 0)),          # d_out^-1
        ],
        out_specs=(pl.BlockSpec((tile_n, fpad), lambda i: (i, 0)),
                   pl.BlockSpec((tile_n, fpad), lambda i: (i, 0))),
        compiler_params=pltpu.CompilerParams(
            dimension_semantics=("parallel",)),
    )(gamma_arr, feat_p, wm_p, wv_p, dout_inv_sqrt, dout_inv)

    # --- kernel 2: tiled aggregation A'^T @ msg with accumulator grid --------
    out_mean_p, out_var_p = pl.pallas_call(
        _aggregate_kernel,
        out_shape=(jax.ShapeDtypeStruct((npad, fpad), jnp.float32),
                   jax.ShapeDtypeStruct((npad, fpad), jnp.float32)),
        grid=(npad // tile_n, npad // tile_n),
        in_specs=[
            pl.BlockSpec((tile_n, tile_n), lambda v, u: (v, u)),  # A'^T tile
            pl.BlockSpec((tile_n, fpad), lambda v, u: (u, 0)),    # msg_mean
            pl.BlockSpec((tile_n, fpad), lambda v, u: (u, 0)),    # msg_var
            pl.BlockSpec((tile_n, 1), lambda v, u: (v, 0)),       # d_in^-1/2
            pl.BlockSpec((tile_n, 1), lambda v, u: (v, 0)),       # d_in^-1
        ],
        out_specs=(pl.BlockSpec((tile_n, fpad), lambda v, u: (v, 0)),
                   pl.BlockSpec((tile_n, fpad), lambda v, u: (v, 0))),
        scratch_shapes=[pltpu.VMEM((tile_n, fpad), jnp.float32),
                        pltpu.VMEM((tile_n, fpad), jnp.float32)],
        compiler_params=pltpu.CompilerParams(
            dimension_semantics=("parallel", "arbitrary")),
    )(at_p, msg_mean, msg_var, din_inv_sqrt, din_inv)

    return out_mean_p[:n, :out_feats], out_var_p[:n, :out_feats]


def reference(feat, w_mean, w_var, adj, *, gamma=1.0):
    mean = jnp.maximum(feat @ w_mean, 0.0)
    var = jnp.maximum(feat @ w_var, 0.0)
    att = jnp.exp(-gamma * var)
    a = adj + jnp.eye(adj.shape[0], dtype=adj.dtype)
    deg_out = jnp.maximum(a.sum(axis=1, keepdims=True), 1.0)
    deg_in = jnp.maximum(a.sum(axis=0, keepdims=True), 1.0)
    norm1 = deg_out ** -0.5 * deg_in ** -0.5
    n1 = a * norm1
    n2 = a * norm1 * norm1
    return n1.T @ (mean * att), n2.T @ (var * att * att)


if __name__ == "__main__":
    key = jax.random.PRNGKey(0)
    k_feat, k_wm, k_wv, k_adj = jax.random.split(key, 4)

    N, IN_FEATS, OUT_FEATS = 8, 16, 32
    GAMMA = 1.0

    feat = jax.random.normal(k_feat, (N, IN_FEATS), dtype=jnp.float32)

    # Glorot (Xavier) uniform init, as in reset_parameters().
    limit = (6.0 / (IN_FEATS + OUT_FEATS)) ** 0.5
    w_mean = jax.random.uniform(k_wm, (IN_FEATS, OUT_FEATS),
                                minval=-limit, maxval=limit, dtype=jnp.float32)
    w_var = jax.random.uniform(k_wv, (IN_FEATS, OUT_FEATS),
                               minval=-limit, maxval=limit, dtype=jnp.float32)

    # Random symmetric binary adjacency, no self loops (added in wrapper).
    upper = (jax.random.uniform(k_adj, (N, N)) > 0.6).astype(jnp.float32)
    upper = jnp.triu(upper, k=1)
    adj = upper + upper.T

    out_mean, out_var = robust_conv(feat, w_mean, w_var, adj,
                                    gamma=GAMMA, add_self_loop=True)
    jax.block_until_ready((out_mean, out_var))

    ref_mean, ref_var = reference(feat, w_mean, w_var, adj, gamma=GAMMA)
    assert out_mean.shape == (N, OUT_FEATS) and out_var.shape == (N, OUT_FEATS)
    assert jnp.allclose(out_mean, ref_mean, atol=1e-4, rtol=1e-4)
    assert jnp.allclose(out_var, ref_var, atol=1e-4, rtol=1e-4)

    print("KERNEL_OK")
</pallas_src>

<mosaic_0001>
module attributes {stable_mosaic.version = 11 : i64} {
  func.func @_transform_kernel(%arg0: i32, %arg1: memref<1x1xf32, #tpu.memory_space<smem>>, %arg2: memref<256x16xf32, #tpu.memory_space<vmem>>, %arg3: memref<16x128xf32, #tpu.memory_space<vmem>>, %arg4: memref<16x128xf32, #tpu.memory_space<vmem>>, %arg5: memref<256x1xf32, #tpu.memory_space<vmem>>, %arg6: memref<256x1xf32, #tpu.memory_space<vmem>>, %arg7: memref<256x128xf32, #tpu.memory_space<vmem>>, %arg8: memref<256x128xf32, #tpu.memory_space<vmem>>) attributes {dimension_semantics = [#tpu.dimension_semantics<parallel>], iteration_bounds = array<i64: 1>, scalar_prefetch = 0 : i64, scratch_operands = 0 : i64, tpu.core_type = #tpu.core_type<tc>, window_params = [{transform_indices = @transform_0, window_bounds = array<i64: 1, 1>}, {transform_indices = @transform_1, window_bounds = array<i64: 256, 16>}, {pipeline_mode = #tpu.pipeline_mode<synchronous>, transform_indices = @transform_2, window_bounds = array<i64: 16, 128>}, {pipeline_mode = #tpu.pipeline_mode<synchronous>, transform_indices = @transform_3, window_bounds = array<i64: 16, 128>}, {transform_indices = @transform_4, window_bounds = array<i64: 256, 1>}, {transform_indices = @transform_5, window_bounds = array<i64: 256, 1>}, {transform_indices = @transform_6, window_bounds = array<i64: 256, 128>}, {transform_indices = @transform_7, window_bounds = array<i64: 256, 128>}]} {
    %c0 = arith.constant 0 : index
    %c0_0 = arith.constant 0 : index
    %0 = memref.load %arg1[%c0, %c0_0] : memref<1x1xf32, #tpu.memory_space<smem>>
    %c0_1 = arith.constant 0 : index
    %c0_2 = arith.constant 0 : index
    %1 = vector.load %arg2[%c0_1, %c0_2] : memref<256x16xf32, #tpu.memory_space<vmem>>, vector<256x16xf32>
    %c0_3 = arith.constant 0 : index
    %c0_4 = arith.constant 0 : index
    %2 = vector.load %arg3[%c0_3, %c0_4] : memref<16x128xf32, #tpu.memory_space<vmem>>, vector<16x128xf32>
    %cst = arith.constant dense<0.000000e+00> : vector<256x128xf32>
    %3 = tpu.matmul %1, %2, %cst {dimension_numbers = #tpu.dot_dimension_numbers<[1], [0], [0], [1], [0, 0, 1, 1], [], []>} : vector<256x16xf32>, vector<16x128xf32>, vector<256x128xf32> -> vector<256x128xf32>
    %cst_5 = arith.constant 0.000000e+00 : f32
    %4 = vector.broadcast %cst_5 : f32 to vector<256x128xf32>
    %5 = arith.maximumf %3, %4 : vector<256x128xf32>
    %c0_6 = arith.constant 0 : index
    %c0_7 = arith.constant 0 : index
    %6 = vector.load %arg4[%c0_6, %c0_7] : memref<16x128xf32, #tpu.memory_space<vmem>>, vector<16x128xf32>
    %cst_8 = arith.constant dense<0.000000e+00> : vector<256x128xf32>
    %7 = tpu.matmul %1, %6, %cst_8 {dimension_numbers = #tpu.dot_dimension_numbers<[1], [0], [0], [1], [0, 0, 1, 1], [], []>} : vector<256x16xf32>, vector<16x128xf32>, vector<256x128xf32> -> vector<256x128xf32>
    %cst_9 = arith.constant 0.000000e+00 : f32
    %8 = vector.broadcast %cst_9 : f32 to vector<256x128xf32>
    %9 = arith.maximumf %7, %8 : vector<256x128xf32>
    %cst_10 = arith.constant 0.000000e+00 : f32
    %10 = arith.subf %cst_10, %0 : f32
    %11 = vector.broadcast %10 : f32 to vector<256x128xf32>
    %12 = arith.mulf %11, %9 : vector<256x128xf32>
    %13 = math.exp %12 : vector<256x128xf32>
    %14 = arith.mulf %5, %13 : vector<256x128xf32>
    %c0_11 = arith.constant 0 : index
    %c0_12 = arith.constant 0 : index
    %15 = vector.load %arg5[%c0_11, %c0_12] : memref<256x1xf32, #tpu.memory_space<vmem>>, vector<256x1xf32>
    %16 = vector.broadcast %15 : vector<256x1xf32> to vector<256x128xf32>
    %17 = arith.mulf %14, %16 : vector<256x128xf32>
    %c0_13 = arith.constant 0 : index
    %c0_14 = arith.constant 0 : index
    %18 = vector.load %arg7[%c0_13, %c0_14] : memref<256x128xf32, #tpu.memory_space<vmem>>, vector<256x128xf32>
    tpu.vector_store %arg7[%c0_13, %c0_14], %17 {strides = array<i32>} : memref<256x128xf32, #tpu.memory_space<vmem>>, vector<256x128xf32>,
    %19 = arith.mulf %13, %13 : vector<256x128xf32>
    %20 = arith.mulf %9, %19 : vector<256x128xf32>
    %c0_15 = arith.constant 0 : index
    %c0_16 = arith.constant 0 : index
    %21 = vector.load %arg6[%c0_15, %c0_16] : memref<256x1xf32, #tpu.memory_space<vmem>>, vector<256x1xf32>
    %22 = vector.broadcast %21 : vector<256x1xf32> to vector<256x128xf32>
    %23 = arith.mulf %20, %22 : vector<256x128xf32>
    %c0_17 = arith.constant 0 : index
    %c0_18 = arith.constant 0 : index
    %24 = vector.load %arg8[%c0_17, %c0_18] : memref<256x128xf32, #tpu.memory_space<vmem>>, vector<256x128xf32>
    tpu.vector_store %arg8[%c0_17, %c0_18], %23 {strides = array<i32>} : memref<256x128xf32, #tpu.memory_space<vmem>>, vector<256x128xf32>,
    return
  }
  func.func @transform_0(%arg0: i32) -> (i32, i32) {
    %c0_i32 = arith.constant 0 : i32
    %c0_i32_0 = arith.constant 0 : i32
    %c0_i32_1 = arith.constant 0 : i32
    return %c0_i32, %c0_i32_0 : i32, i32
  }
  func.func @transform_1(%arg0: i32) -> (i32, i32) {
    %c0_i32 = arith.constant 0 : i32
    %c0_i32_0 = arith.constant 0 : i32
    return %arg0, %c0_i32 : i32, i32
  }
  func.func @transform_2(%arg0: i32) -> (i32, i32) {
    %c0_i32 = arith.constant 0 : i32
    %c0_i32_0 = arith.constant 0 : i32
    %c0_i32_1 = arith.constant 0 : i32
    return %c0_i32, %c0_i32_0 : i32, i32
  }
  func.func @transform_3(%arg0: i32) -> (i32, i32) {
    %c0_i32 = arith.constant 0 : i32
    %c0_i32_0 = arith.constant 0 : i32
    %c0_i32_1 = arith.constant 0 : i32
    return %c0_i32, %c0_i32_0 : i32, i32
  }
  func.func @transform_4(%arg0: i32) -> (i32, i32) {
    %c0_i32 = arith.constant 0 : i32
    %c0_i32_0 = arith.constant 0 : i32
    return %arg0, %c0_i32 : i32, i32
  }
  func.func @transform_5(%arg0: i32) -> (i32, i32) {
    %c0_i32 = arith.constant 0 : i32
    %c0_i32_0 = arith.constant 0 : i32
    return %arg0, %c0_i32 : i32, i32
  }
  func.func @transform_6(%arg0: i32) -> (i32, i32) {
    %c0_i32 = arith.constant 0 : i32
    %c0_i32_0 = arith.constant 0 : i32
    return %arg0, %c0_i32 : i32, i32
  }
  func.func @transform_7(%arg0: i32) -> (i32, i32) {
    %c0_i32 = arith.constant 0 : i32
    %c0_i32_0 = arith.constant 0 : i32
    return %arg0, %c0_i32 : i32, i32
  }
}

</mosaic_0001>

<llo_original>
// kernel: tpu_custom_call.1
$region0: #{tpu_custom_call.1}
  #allocation0 [shape = 'u32[]', space=smem, size = 0x4, offset = 0x4, fixed_abs, tag = 'smem constant byte address 0x4 - core index']
  #allocation1 [shape = 'u32[144,128]{1,0:T(1,128)}', space=vmem, size = 0x12000, scoped, tag = 'internal scratch']
  #allocation2 [shape = 'f32[1,1]{1,0:T(1,128)S(6)}', space=smem, size = 0x200, scoped, tag = 'scoped memory for tpu_custom_call.1']
  %s0 = inlined_call_operand.<no memory space> [shape: f32[1,1], index: 0, kind: input, shape index: {}]
  %s1 = inlined_call_operand.vmem [shape: f32[256,16], index: 1, kind: input, shape index: {}]
  %s2 = inlined_call_operand.vmem [shape: f32[16,128], index: 2, kind: input, shape index: {}]
  %s3 = inlined_call_operand.vmem [shape: f32[16,128], index: 3, kind: input, shape index: {}]
  %s4 = inlined_call_operand.vmem [shape: f32[256,1], index: 4, kind: input, shape index: {}]
  %s5 = inlined_call_operand.vmem [shape: f32[256,1], index: 5, kind: input, shape index: {}]
  %s6 = inlined_call_operand.hbm [shape: f32[256,128], index: 6, kind: output, shape index: {0}]
  %s7 = inlined_call_operand.hbm [shape: f32[256,128], index: 7, kind: output, shape index: {1}]
  %8 = xla_tuple %s6, %s7
  %s9 = sld [smem:[#allocation0]]
  $region42: #{tpu_custom_call.1} parent=0
    _
  %s11 = ssub.s32 1, %s9
  %s12 = scalar_select 0, %s11, %s9
  %13 = sst [smem:[#allocation2]] %s0
  $region1: #{tpu_custom_call.1} parent=0
    #allocation3 [shape = 'u8[131072]{0}', space=vmem, size = 0x20000, scoped, tag = 'output window, operand 0, single buffered']
    #allocation4 [shape = 's32[1]{0}', space=sflag, size = 0x4, scoped, tag = 'scoped memory for tpu_custom_call.1']
    #allocation5 [shape = 'u8[131072]{0}', space=vmem, size = 0x20000, scoped, tag = 'output window, operand 1, single buffered']
    #allocation6 [shape = 's32[1]{0}', space=sflag, size = 0x4, scoped, tag = 'scoped memory for tpu_custom_call.1']
    %14 = vsyncpa [#allocation4], 0
    %15 = vsyncpa [#allocation6], 0
    // Predicated region
    $region2: #{tpu_custom_call.1} parent=1 // pred_check
      _
    $region3: #{tpu_custom_call.1} parent=1 // pred_check_branch
      %17 = sbr.rel (0) target = $region5
    $region4: #{tpu_custom_call.1} parent=1 // pred_region
      _
    $region5: #{tpu_custom_call.1} parent=1 // pred_fallthru
      _
    // Predicated region
    $region6: #{tpu_custom_call.1} parent=1 // pred_check
      _
    $region7: #{tpu_custom_call.1} parent=1 // pred_check_branch
      %19 = sbr.rel (0) target = $region9
    $region8: #{tpu_custom_call.1} parent=1 // pred_region
      _
    $region9: #{tpu_custom_call.1} parent=1 // pred_fallthru
      _
    // Predicated region
    $region10: #{tpu_custom_call.1} parent=1 // pred_check
      _
    $region11: #{tpu_custom_call.1} parent=1 // pred_check_branch
      %21 = sbr.rel (0) target = $region13
    $region12: #{tpu_custom_call.1} parent=1 // pred_region
      _
    $region13: #{tpu_custom_call.1} parent=1 // pred_fallthru
      _
    // Predicated region
    $region14: #{tpu_custom_call.1} parent=1 // pred_check
      _
    $region15: #{tpu_custom_call.1} parent=1 // pred_check_branch
      %23 = sbr.rel (0) target = $region17
    $region16: #{tpu_custom_call.1} parent=1 // pred_region
      _
    $region17: #{tpu_custom_call.1} parent=1 // pred_fallthru
      _
    // Predicated region
    $region18: #{tpu_custom_call.1} parent=1 // pred_check
      _
    $region19: #{tpu_custom_call.1} parent=1 // pred_check_branch
      %25 = sbr.rel (0) target = $region21
    $region20: #{tpu_custom_call.1} parent=1 // pred_region
      _
    $region21: #{tpu_custom_call.1} parent=1 // pred_fallthru
      _
    // Predicated region
    $region22: #{tpu_custom_call.1} parent=1 // pred_check
      _
    $region23: #{tpu_custom_call.1} parent=1 // pred_check_branch
      %27 = sbr.rel (0) target = $region25
    $region24: #{tpu_custom_call.1} parent=1 // pred_region
      _
    $region25: #{tpu_custom_call.1} parent=1 // pred_fallthru
      _
    %s28 = sld [smem:[#allocation2]]
    %v29 = vld [vmem:[%s1] sm:$0xff]
    %v30 = vld [vmem:[%s1 + $0x8] sm:$0xff]
    %v31 = vld [vmem:[%s1 + $0x10] sm:$0xff]
    %v32 = vld [vmem:[%s1 + $0x18] sm:$0xff]
    %v33 = vld [vmem:[%s1 + $0x20] sm:$0xff]
    %v34 = vld [vmem:[%s1 + $0x28] sm:$0xff]
    %v35 = vld [vmem:[%s1 + $0x30] sm:$0xff]
    %v36 = vld [vmem:[%s1 + $0x38] sm:$0xff]
    %v37 = vld [vmem:[%s1 + $0x40] sm:$0xff]
    %v38 = vld [vmem:[%s1 + $0x48] sm:$0xff]
    %v39 = vld [vmem:[%s1 + $0x50] sm:$0xff]
    %v40 = vld [vmem:[%s1 + $0x58] sm:$0xff]
    %v41 = vld [vmem:[%s1 + $0x60] sm:$0xff]
    %v42 = vld [vmem:[%s1 + $0x68] sm:$0xff]
    %v43 = vld [vmem:[%s1 + $0x70] sm:$0xff]
    %v44 = vld [vmem:[%s1 + $0x78] sm:$0xff]
    %v45 = vld [vmem:[%s1 + $0x80] sm:$0xff]
    %v46 = vld [vmem:[%s1 + $0x88] sm:$0xff]
    %v47 = vld [vmem:[%s1 + $0x90] sm:$0xff]
    %v48 = vld [vmem:[%s1 + $0x98] sm:$0xff]
    %v49 = vld [vmem:[%s1 + $0xa0] sm:$0xff]
    %v50 = vld [vmem:[%s1 + $0xa8] sm:$0xff]
    %v51 = vld [vmem:[%s1 + $0xb0] sm:$0xff]
    %v52 = vld [vmem:[%s1 + $0xb8] sm:$0xff]
    %v53 = vld [vmem:[%s1 + $0xc0] sm:$0xff]
    %v54 = vld [vmem:[%s1 + $0xc8] sm:$0xff]
    %v55 = vld [vmem:[%s1 + $0xd0] sm:$0xff]
    %v56 = vld [vmem:[%s1 + $0xd8] sm:$0xff]
    %v57 = vld [vmem:[%s1 + $0xe0] sm:$0xff]
    %v58 = vld [vmem:[%s1 + $0xe8] sm:$0xff]
    %v59 = vld [vmem:[%s1 + $0xf0] sm:$0xff]
    %v60 = vld [vmem:[%s1 + $0xf8] sm:$0xff]
    %v61 = vld [vmem:[%s2] sm:$0xff]
    %v62 = vld [vmem:[%s2 + $0x8] sm:$0xff]
    %vm63 = vcmask 130048
    %v65 = vsel %vm63, %v29, 0
    %v68 = vsel %vm63, %v30, 0
    %v71 = vsel %vm63, %v31, 0
    %v74 = vsel %vm63, %v32, 0
    %v77 = vsel %vm63, %v33, 0
    %v80 = vsel %vm63, %v34, 0
    %v83 = vsel %vm63, %v35, 0
    %v86 = vsel %vm63, %v36, 0
    %v89 = vsel %vm63, %v37, 0
    %v92 = vsel %vm63, %v38, 0
    %v95 = vsel %vm63, %v39, 0
    %v98 = vsel %vm63, %v40, 0
    %v101 = vsel %vm63, %v41, 0
    %v104 = vsel %vm63, %v42, 0
    %v107 = vsel %vm63, %v43, 0
    %v110 = vsel %vm63, %v44, 0
    %v113 = vsel %vm63, %v45, 0
    %v116 = vsel %vm63, %v46, 0
    %v119 = vsel %vm63, %v47, 0
    %v122 = vsel %vm63, %v48, 0
    %v125 = vsel %vm63, %v49, 0
    %v128 = vsel %vm63, %v50, 0
    %v131 = vsel %vm63, %v51, 0
    %v134 = vsel %vm63, %v52, 0
    %v137 = vsel %vm63, %v53, 0
    %v140 = vsel %vm63, %v54, 0
    %v143 = vsel %vm63, %v55, 0
    %v146 = vsel %vm63, %v56, 0
    %v149 = vsel %vm63, %v57, 0
    %v152 = vsel %vm63, %v58, 0
    %v155 = vsel %vm63, %v59, 0
    %v158 = vsel %vm63, %v60, 0
    %160 = vmatprep.subr.mxu0 0.0
    %161 = vmatpush1.msra.mxu0 0.0
    %162 = vmatprep.subr.mxu0 0.0
    %163 = vmatpush1.msra.mxu0 0.0
    %164 = vmatprep.subr.mxu0 0.0
    %165 = vmatpush1.msra.mxu0 0.0
    %166 = vmatprep.subr.mxu0 0.0
    %167 = vmatpush1.msra.mxu0 0.0
    %168 = vmatprep.subr.mxu0 0.0
    %169 = vmatpush1.msra.mxu0 0.0
    %170 = vmatprep.subr.mxu0 0.0
    %171 = vmatpush1.msra.mxu0 0.0
    %172 = vmatprep.subr.mxu0 0.0
    %173 = vmatpush1.msra.mxu0 0.0
    %174 = vmatprep.subr.mxu0 0.0
    %175 = vmatpush1.msra.mxu0 0.0
    %176 = vmatprep.subr.mxu0 0.0
    %177 = vmatpush1.msra.mxu0 0.0
    %178 = vmatprep.subr.mxu0 0.0
    %179 = vmatpush1.msra.mxu0 0.0
    %180 = vmatprep.subr.mxu0 0.0
    %181 = vmatpush1.msra.mxu0 0.0
    %182 = vmatprep.subr.mxu0 0.0
    %183 = vmatpush1.msra.mxu0 0.0
    %184 = vmatprep.subr.mxu0 0.0
    %185 = vmatpush1.msra.mxu0 0.0
    %186 = vmatprep.subr.mxu0 0.0
    %187 = vmatpush1.msra.mxu0 0.0
    %188 = vmatprep.subr.mxu0 0.0
    %189 = vmatpush1.msra.mxu0 %v62
    %190 = vmatprep.subr.mxu0 0.0
    %191 = vmatpush1.msra.mxu0 %v61
    %192 = vmatprep.subr.mxu0 0.0
    %193 = vmatpush2.msra.mxu0 0.0
    %194 = vmatprep.subr.mxu0 0.0
    %195 = vmatpush2.msra.mxu0 0.0
    %196 = vmatprep.subr.mxu0 0.0
    %197 = vmatpush2.msra.mxu0 0.0
    %198 = vmatprep.subr.mxu0 0.0
    %199 = vmatpush2.msra.mxu0 0.0
    %200 = vmatprep.subr.mxu0 0.0
    %201 = vmatpush2.msra.mxu0 0.0
    %202 = vmatprep.subr.mxu0 0.0
    %203 = vmatpush2.msra.mxu0 0.0
    %204 = vmatprep.subr.mxu0 0.0
    %205 = vmatpush2.msra.mxu0 0.0
    %206 = vmatprep.subr.mxu0 0.0
    %207 = vmatpush2.msra.mxu0 0.0
    %208 = vmatprep.subr.mxu0 0.0
    %209 = vmatpush2.msra.mxu0 0.0
    %210 = vmatprep.subr.mxu0 0.0
    %211 = vmatpush2.msra.mxu0 0.0
    %212 = vmatprep.subr.mxu0 0.0
    %213 = vmatpush2.msra.mxu0 0.0
    %214 = vmatprep.subr.mxu0 0.0
    %215 = vmatpush2.msra.mxu0 0.0
    %216 = vmatprep.subr.mxu0 0.0
    %217 = vmatpush2.msra.mxu0 0.0
    %218 = vmatprep.subr.mxu0 0.0
    %219 = vmatpush2.msra.mxu0 0.0
    %220 = vmatprep.subr.mxu0 0.0
    %221 = vmatpush2.msra.mxu0 0.0
    %222 = vmatprep.subr.mxu0 0.0
    %223 = vmatpush2.msra.mxu0 0.0
    %224 = vmatprep.mubr.f32.mxu0 0.0
    %225 = vmatmul.mubr.f32.gmra.mxu0 %v65
    %v226 = vpop.f32.mrf.mxu0
    %v227 = vadd.f32 0.0, %v226
    %v228 = vpop.f32.mrf.mxu0
    %229 = vmatprep.mubr.f32.mxu0 0.0
    %230 = vmatmul.mubr.f32.gmra.mxu0 %v68
    %v231 = vpop.f32.mrf.mxu0
    %v232 = vadd.f32 0.0, %v231
    %v233 = vpop.f32.mrf.mxu0
    %234 = vmatprep.mubr.f32.mxu0 0.0
    %235 = vmatmul.mubr.f32.gmra.mxu0 %v71
    %v236 = vpop.f32.mrf.mxu0
    %v237 = vadd.f32 0.0, %v236
    %v238 = vpop.f32.mrf.mxu0
    %239 = vmatprep.mubr.f32.mxu0 0.0
    %240 = vmatmul.mubr.f32.gmra.mxu0 %v74
    %v241 = vpop.f32.mrf.mxu0
    %v242 = vadd.f32 0.0, %v241
    %v243 = vpop.f32.mrf.mxu0
    %244 = vmatprep.mubr.f32.mxu0 0.0
    %245 = vmatmul.mubr.f32.gmra.mxu0 %v77
    %v246 = vpop.f32.mrf.mxu0
    %v247 = vadd.f32 0.0, %v246
    %v248 = vpop.f32.mrf.mxu0
    %249 = vmatprep.mubr.f32.mxu0 0.0
    %250 = vmatmul.mubr.f32.gmra.mxu0 %v80
    %v251 = vpop.f32.mrf.mxu0
    %v252 = vadd.f32 0.0, %v251
    %v253 = vpop.f32.mrf.mxu0
    %254 = vmatprep.mubr.f32.mxu0 0.0
    %255 = vmatmul.mubr.f32.gmra.mxu0 %v83
    %v256 = vpop.f32.mrf.mxu0
    %v257 = vadd.f32 0.0, %v256
    %v258 = vpop.f32.mrf.mxu0
    %259 = vmatprep.mubr.f32.mxu0 0.0
    %260 = vmatmul.mubr.f32.gmra.mxu0 %v86
    %v261 = vpop.f32.mrf.mxu0
    %v262 = vadd.f32 0.0, %v261
    %v263 = vpop.f32.mrf.mxu0
    %264 = vmatprep.mubr.f32.mxu0 0.0
    %265 = vmatmul.mubr.f32.gmra.mxu0 %v89
    %v266 = vpop.f32.mrf.mxu0
    %v267 = vadd.f32 0.0, %v266
    %v268 = vpop.f32.mrf.mxu0
    %269 = vmatprep.mubr.f32.mxu0 0.0
    %270 = vmatmul.mubr.f32.gmra.mxu0 %v92
    %v271 = vpop.f32.mrf.mxu0
    %v272 = vadd.f32 0.0, %v271
    %v273 = vpop.f32.mrf.mxu0
    %274 = vmatprep.mubr.f32.mxu0 0.0
    %275 = vmatmul.mubr.f32.gmra.mxu0 %v95
    %v276 = vpop.f32.mrf.mxu0
    %v277 = vadd.f32 0.0, %v276
    %v278 = vpop.f32.mrf.mxu0
    %279 = vmatprep.mubr.f32.mxu0 0.0
    %280 = vmatmul.mubr.f32.gmra.mxu0 %v98
    %v281 = vpop.f32.mrf.mxu0
    %v282 = vadd.f32 0.0, %v281
    %v283 = vpop.f32.mrf.mxu0
    %284 = vmatprep.mubr.f32.mxu0 0.0
    %285 = vmatmul.mubr.f32.gmra.mxu0 %v101
    %v286 = vpop.f32.mrf.mxu0
    %v287 = vadd.f32 0.0, %v286
    %v288 = vpop.f32.mrf.mxu0
    %289 = vmatprep.mubr.f32.mxu0 0.0
    %290 = vmatmul.mubr.f32.gmra.mxu0 %v104
    %v291 = vpop.f32.mrf.mxu0
    %v292 = vadd.f32 0.0, %v291
    %v293 = vpop.f32.mrf.mxu0
    %294 = vmatprep.mubr.f32.mxu0 0.0
    %295 = vmatmul.mubr.f32.gmra.mxu0 %v107
    %v296 = vpop.f32.mrf.mxu0
    %v297 = vadd.f32 0.0, %v296
    %v298 = vpop.f32.mrf.mxu0
    %299 = vmatprep.mubr.f32.mxu0 0.0
    %300 = vmatmul.mubr.f32.gmra.mxu0 %v110
    %v301 = vpop.f32.mrf.mxu0
    %v302 = vadd.f32 0.0, %v301
    %v303 = vpop.f32.mrf.mxu0
    %304 = vmatprep.mubr.f32.mxu0 0.0
    %305 = vmatmul.mubr.f32.gmra.mxu0 %v113
    %v306 = vpop.f32.mrf.mxu0
    %v307 = vadd.f32 0.0, %v306
    %v308 = vpop.f32.mrf.mxu0
    %309 = vmatprep.mubr.f32.mxu0 0.0
    %310 = vmatmul.mubr.f32.gmra.mxu0 %v116
    %v311 = vpop.f32.mrf.mxu0
    %v312 = vadd.f32 0.0, %v311
    %v313 = vpop.f32.mrf.mxu0
    %314 = vmatprep.mubr.f32.mxu0 0.0
    %315 = vmatmul.mubr.f32.gmra.mxu0 %v119
    %v316 = vpop.f32.mrf.mxu0
    %v317 = vadd.f32 0.0, %v316
    %v318 = vpop.f32.mrf.mxu0
    %319 = vmatprep.mubr.f32.mxu0 0.0
    %320 = vmatmul.mubr.f32.gmra.mxu0 %v122
    %v321 = vpop.f32.mrf.mxu0
    %v322 = vadd.f32 0.0, %v321
    %v323 = vpop.f32.mrf.mxu0
    %324 = vmatprep.mubr.f32.mxu0 0.0
    %325 = vmatmul.mubr.f32.gmra.mxu0 %v125
    %v326 = vpop.f32.mrf.mxu0
    %v327 = vadd.f32 0.0, %v326
    %v328 = vpop.f32.mrf.mxu0
    %329 = vmatprep.mubr.f32.mxu0 0.0
    %330 = vmatmul.mubr.f32.gmra.mxu0 %v128
    %v331 = vpop.f32.mrf.mxu0
    %v332 = vadd.f32 0.0, %v331
    %v333 = vpop.f32.mrf.mxu0
    %334 = vmatprep.mubr.f32.mxu0 0.0
    %335 = vmatmul.mubr.f32.gmra.mxu0 %v131
    %v336 = vpop.f32.mrf.mxu0
    %v337 = vadd.f32 0.0, %v336
    %v338 = vpop.f32.mrf.mxu0
    %339 = vmatprep.mubr.f32.mxu0 0.0
    %340 = vmatmul.mubr.f32.gmra.mxu0 %v134
    %v341 = vpop.f32.mrf.mxu0
    %v342 = vadd.f32 0.0, %v341
    %v343 = vpop.f32.mrf.mxu0
    %344 = vmatprep.mubr.f32.mxu0 0.0
    %345 = vmatmul.mubr.f32.gmra.mxu0 %v137
    %v346 = vpop.f32.mrf.mxu0
    %v347 = vadd.f32 0.0, %v346
    %v348 = vpop.f32.mrf.mxu0
    %349 = vmatprep.mubr.f32.mxu0 0.0
    %350 = vmatmul.mubr.f32.gmra.mxu0 %v140
    %v351 = vpop.f32.mrf.mxu0
    %v352 = vadd.f32 0.0, %v351
    %v353 = vpop.f32.mrf.mxu0
    %354 = vmatprep.mubr.f32.mxu0 0.0
    %355 = vmatmul.mubr.f32.gmra.mxu0 %v143
    %v356 = vpop.f32.mrf.mxu0
    %v357 = vadd.f32 0.0, %v356
    %v358 = vpop.f32.mrf.mxu0
    %359 = vmatprep.mubr.f32.mxu0 0.0
    %360 = vmatmul.mubr.f32.gmra.mxu0 %v146
    %v361 = vpop.f32.mrf.mxu0
    %v362 = vadd.f32 0.0, %v361
    %v363 = vpop.f32.mrf.mxu0
    %364 = vmatprep.mubr.f32.mxu0 0.0
    %365 = vmatmul.mubr.f32.gmra.mxu0 %v149
    %v366 = vpop.f32.mrf.mxu0
    %v367 = vadd.f32 0.0, %v366
    %v368 = vpop.f32.mrf.mxu0
    %369 = vmatprep.mubr.f32.mxu0 0.0
    %370 = vmatmul.mubr.f32.gmra.mxu0 %v152
    %v371 = vpop.f32.mrf.mxu0
    %v372 = vadd.f32 0.0, %v371
    %v373 = vpop.f32.mrf.mxu0
    %374 = vmatprep.mubr.f32.mxu0 0.0
    %375 = vmatmul.mubr.f32.gmra.mxu0 %v155
    %v376 = vpop.f32.mrf.mxu0
    %v377 = vadd.f32 0.0, %v376
    %v378 = vpop.f32.mrf.mxu0
    %379 = vmatprep.mubr.f32.mxu0 0.0
    %380 = vmatmul.mubr.f32.gmra.mxu0 %v158
    %v381 = vpop.f32.mrf.mxu0
    %v382 = vadd.f32 0.0, %v381
    %v383 = vpop.f32.mrf.mxu0
    %384 = vdwg.mxu0
    %v385 = vmax.f32 %v227, 0.0
    %v386 = vmax.f32 %v232, 0.0
    %v387 = vmax.f32 %v237, 0.0
    %v388 = vmax.f32 %v242, 0.0
    %v389 = vmax.f32 %v247, 0.0
    %v390 = vmax.f32 %v252, 0.0
    %v391 = vmax.f32 %v257, 0.0
    %v392 = vmax.f32 %v262, 0.0
    %v393 = vmax.f32 %v267, 0.0
    %v394 = vmax.f32 %v272, 0.0
    %v395 = vmax.f32 %v277, 0.0
    %v396 = vmax.f32 %v282, 0.0
    %v397 = vmax.f32 %v287, 0.0
    %v398 = vmax.f32 %v292, 0.0
    %v399 = vmax.f32 %v297, 0.0
    %v400 = vmax.f32 %v302, 0.0
    %v401 = vmax.f32 %v307, 0.0
    %v402 = vmax.f32 %v312, 0.0
    %v403 = vmax.f32 %v317, 0.0
    %v404 = vmax.f32 %v322, 0.0
    %v405 = vmax.f32 %v327, 0.0
    %v406 = vmax.f32 %v332, 0.0
    %v407 = vmax.f32 %v337, 0.0
    %v408 = vmax.f32 %v342, 0.0
    %v409 = vmax.f32 %v347, 0.0
    %v410 = vmax.f32 %v352, 0.0
    %v411 = vmax.f32 %v357, 0.0
    %v412 = vmax.f32 %v362, 0.0
    %v413 = vmax.f32 %v367, 0.0
    %v414 = vmax.f32 %v372, 0.0
    %v415 = vmax.f32 %v377, 0.0
    %v416 = vmax.f32 %v382, 0.0
    %v417 = vld [vmem:[%s3] sm:$0xff]
    %v418 = vld [vmem:[%s3 + $0x8] sm:$0xff]
    %419 = vmatprep.subr.mxu0 0.0
    %420 = vmatpush1.msra.mxu0 0.0
    %421 = vmatprep.subr.mxu0 0.0
    %422 = vmatpush1.msra.mxu0 0.0
    %423 = vmatprep.subr.mxu0 0.0
    %424 = vmatpush1.msra.mxu0 0.0
    %425 = vmatprep.subr.mxu0 0.0
    %426 = vmatpush1.msra.mxu0 0.0
    %427 = vmatprep.subr.mxu0 0.0
    %428 = vmatpush1.msra.mxu0 0.0
    %429 = vmatprep.subr.mxu0 0.0
    %430 = vmatpush1.msra.mxu0 0.0
    %431 = vmatprep.subr.mxu0 0.0
    %432 = vmatpush1.msra.mxu0 0.0
    %433 = vmatprep.subr.mxu0 0.0
    %434 = vmatpush1.msra.mxu0 0.0
    %435 = vmatprep.subr.mxu0 0.0
    %436 = vmatpush1.msra.mxu0 0.0
    %437 = vmatprep.subr.mxu0 0.0
    %438 = vmatpush1.msra.mxu0 0.0
    %439 = vmatprep.subr.mxu0 0.0
    %440 = vmatpush1.msra.mxu0 0.0
    %441 = vmatprep.subr.mxu0 0.0
    %442 = vmatpush1.msra.mxu0 0.0
    %443 = vmatprep.subr.mxu0 0.0
    %444 = vmatpush1.msra.mxu0 0.0
    %445 = vmatprep.subr.mxu0 0.0
    %446 = vmatpush1.msra.mxu0 0.0
    %447 = vmatprep.subr.mxu0 0.0
    %448 = vmatpush1.msra.mxu0 %v418
    %449 = vmatprep.subr.mxu0 0.0
    %450 = vmatpush1.msra.mxu0 %v417
    %451 = vmatprep.subr.mxu0 0.0
    %452 = vmatpush2.msra.mxu0 0.0
    %453 = vmatprep.subr.mxu0 0.0
    %454 = vmatpush2.msra.mxu0 0.0
    %455 = vmatprep.subr.mxu0 0.0
    %456 = vmatpush2.msra.mxu0 0.0
    %457 = vmatprep.subr.mxu0 0.0
    %458 = vmatpush2.msra.mxu0 0.0
    %459 = vmatprep.subr.mxu0 0.0
    %460 = vmatpush2.msra.mxu0 0.0
    %461 = vmatprep.subr.mxu0 0.0
    %462 = vmatpush2.msra.mxu0 0.0
    %463 = vmatprep.subr.mxu0 0.0
    %464 = vmatpush2.msra.mxu0 0.0
    %465 = vmatprep.subr.mxu0 0.0
    %466 = vmatpush2.msra.mxu0 0.0
    %467 = vmatprep.subr.mxu0 0.0
    %468 = vmatpush2.msra.mxu0 0.0
    %469 = vmatprep.subr.mxu0 0.0
    %470 = vmatpush2.msra.mxu0 0.0
    %471 = vmatprep.subr.mxu0 0.0
    %472 = vmatpush2.msra.mxu0 0.0
    %473 = vmatprep.subr.mxu0 0.0
    %474 = vmatpush2.msra.mxu0 0.0
    %475 = vmatprep.subr.mxu0 0.0
    %476 = vmatpush2.msra.mxu0 0.0
    %477 = vmatprep.subr.mxu0 0.0
    %478 = vmatpush2.msra.mxu0 0.0
    %479 = vmatprep.subr.mxu0 0.0
    %480 = vmatpush2.msra.mxu0 0.0
    %481 = vmatprep.subr.mxu0 0.0
    %482 = vmatpush2.msra.mxu0 0.0
    %483 = vmatprep.mubr.f32.mxu0 0.0
    %484 = vmatmul.mubr.f32.gmra.mxu0 %v65
    %v485 = vpop.f32.mrf.mxu0
    %v486 = vadd.f32 0.0, %v485
    %v487 = vpop.f32.mrf.mxu0
    %488 = vmatprep.mubr.f32.mxu0 0.0
    %489 = vmatmul.mubr.f32.gmra.mxu0 %v68
    %v490 = vpop.f32.mrf.mxu0
    %v491 = vadd.f32 0.0, %v490
    %v492 = vpop.f32.mrf.mxu0
    %493 = vmatprep.mubr.f32.mxu0 0.0
    %494 = vmatmul.mubr.f32.gmra.mxu0 %v71
    %v495 = vpop.f32.mrf.mxu0
    %v496 = vadd.f32 0.0, %v495
    %v497 = vpop.f32.mrf.mxu0
    %498 = vmatprep.mubr.f32.mxu0 0.0
    %499 = vmatmul.mubr.f32.gmra.mxu0 %v74
    %v500 = vpop.f32.mrf.mxu0
    %v501 = vadd.f32 0.0, %v500
    %v502 = vpop.f32.mrf.mxu0
    %503 = vmatprep.mubr.f32.mxu0 0.0
    %504 = vmatmul.mubr.f32.gmra.mxu0 %v77
    %v505 = vpop.f32.mrf.mxu0
    %v506 = vadd.f32 0.0, %v505
    %v507 = vpop.f32.mrf.mxu0
    %508 = vmatprep.mubr.f32.mxu0 0.0
    %509 = vmatmul.mubr.f32.gmra.mxu0 %v80
    %v510 = vpop.f32.mrf.mxu0
    %v511 = vadd.f32 0.0, %v510
    %v512 = vpop.f32.mrf.mxu0
    %513 = vmatprep.mubr.f32.mxu0 0.0
    %514 = vmatmul.mubr.f32.gmra.mxu0 %v83
    %v515 = vpop.f32.mrf.mxu0
    %v516 = vadd.f32 0.0, %v515
    %v517 = vpop.f32.mrf.mxu0
    %518 = vmatprep.mubr.f32.mxu0 0.0
    %519 = vmatmul.mubr.f32.gmra.mxu0 %v86
    %v520 = vpop.f32.mrf.mxu0
    %v521 = vadd.f32 0.0, %v520
    %v522 = vpop.f32.mrf.mxu0
    %523 = vmatprep.mubr.f32.mxu0 0.0
    %524 = vmatmul.mubr.f32.gmra.mxu0 %v89
    %v525 = vpop.f32.mrf.mxu0
    %v526 = vadd.f32 0.0, %v525
    %v527 = vpop.f32.mrf.mxu0
    %528 = vmatprep.mubr.f32.mxu0 0.0
    %529 = vmatmul.mubr.f32.gmra.mxu0 %v92
    %v530 = vpop.f32.mrf.mxu0
    %v531 = vadd.f32 0.0, %v530
    %v532 = vpop.f32.mrf.mxu0
    %533 = vmatprep.mubr.f32.mxu0 0.0
    %534 = vmatmul.mubr.f32.gmra.mxu0 %v95
    %v535 = vpop.f32.mrf.mxu0
    %v536 = vadd.f32 0.0, %v535
    %v537 = vpop.f32.mrf.mxu0
    %538 = vmatprep.mubr.f32.mxu0 0.0
    %539 = vmatmul.mubr.f32.gmra.mxu0 %v98
    %v540 = vpop.f32.mrf.mxu0
    %v541 = vadd.f32 0.0, %v540
    %v542 = vpop.f32.mrf.mxu0
    %543 = vmatprep.mubr.f32.mxu0 0.0
    %544 = vmatmul.mubr.f32.gmra.mxu0 %v101
    %v545 = vpop.f32.mrf.mxu0
    %v546 = vadd.f32 0.0, %v545
    %v547 = vpop.f32.mrf.mxu0
    %548 = vmatprep.mubr.f32.mxu0 0.0
    %549 = vmatmul.mubr.f32.gmra.mxu0 %v104
    %v550 = vpop.f32.mrf.mxu0
    %v551 = vadd.f32 0.0, %v550
    %v552 = vpop.f32.mrf.mxu0
    %553 = vmatprep.mubr.f32.mxu0 0.0
    %554 = vmatmul.mubr.f32.gmra.mxu0 %v107
    %v555 = vpop.f32.mrf.mxu0
    %v556 = vadd.f32 0.0, %v555
    %v557 = vpop.f32.mrf.mxu0
    %558 = vmatprep.mubr.f32.mxu0 0.0
    %559 = vmatmul.mubr.f32.gmra.mxu0 %v110
    %v560 = vpop.f32.mrf.mxu0
    %v561 = vadd.f32 0.0, %v560
    %v562 = vpop.f32.mrf.mxu0
    %563 = vmatprep.mubr.f32.mxu0 0.0
    %564 = vmatmul.mubr.f32.gmra.mxu0 %v113
    %v565 = vpop.f32.mrf.mxu0
    %v566 = vadd.f32 0.0, %v565
    %v567 = vpop.f32.mrf.mxu0
    %568 = vmatprep.mubr.f32.mxu0 0.0
    %569 = vmatmul.mubr.f32.gmra.mxu0 %v116
    %v570 = vpop.f32.mrf.mxu0
    %v571 = vadd.f32 0.0, %v570
    %v572 = vpop.f32.mrf.mxu0
    %573 = vmatprep.mubr.f32.mxu0 0.0
    %574 = vmatmul.mubr.f32.gmra.mxu0 %v119
    %v575 = vpop.f32.mrf.mxu0
    %v576 = vadd.f32 0.0, %v575
    %v577 = vpop.f32.mrf.mxu0
    %578 = vmatprep.mubr.f32.mxu0 0.0
    %579 = vmatmul.mubr.f32.gmra.mxu0 %v122
    %v580 = vpop.f32.mrf.mxu0
    %v581 = vadd.f32 0.0, %v580
    %v582 = vpop.f32.mrf.mxu0
    %583 = vmatprep.mubr.f32.mxu0 0.0
    %584 = vmatmul.mubr.f32.gmra.mxu0 %v125
    %v585 = vpop.f32.mrf.mxu0
    %v586 = vadd.f32 0.0, %v585
    %v587 = vpop.f32.mrf.mxu0
    %588 = vmatprep.mubr.f32.mxu0 0.0
    %589 = vmatmul.mubr.f32.gmra.mxu0 %v128
    %v590 = vpop.f32.mrf.mxu0
    %v591 = vadd.f32 0.0, %v590
    %v592 = vpop.f32.mrf.mxu0
    %593 = vmatprep.mubr.f32.mxu0 0.0
    %594 = vmatmul.mubr.f32.gmra.mxu0 %v131
    %v595 = vpop.f32.mrf.mxu0
    %v596 = vadd.f32 0.0, %v595
    %v597 = vpop.f32.mrf.mxu0
    %598 = vmatprep.mubr.f32.mxu0 0.0
    %599 = vmatmul.mubr.f32.gmra.mxu0 %v134
    %v600 = vpop.f32.mrf.mxu0
    %v601 = vadd.f32 0.0, %v600
    %v602 = vpop.f32.mrf.mxu0
    %603 = vmatprep.mubr.f32.mxu0 0.0
    %604 = vmatmul.mubr.f32.gmra.mxu0 %v137
    %v605 = vpop.f32.mrf.mxu0
    %v606 = vadd.f32 0.0, %v605
    %v607 = vpop.f32.mrf.mxu0
    %608 = vmatprep.mubr.f32.mxu0 0.0
    %609 = vmatmul.mubr.f32.gmra.mxu0 %v140
    %v610 = vpop.f32.mrf.mxu0
    %v611 = vadd.f32 0.0, %v610
    %v612 = vpop.f32.mrf.mxu0
    %613 = vmatprep.mubr.f32.mxu0 0.0
    %614 = vmatmul.mubr.f32.gmra.mxu0 %v143
    %v615 = vpop.f32.mrf.mxu0
    %v616 = vadd.f32 0.0, %v615
    %v617 = vpop.f32.mrf.mxu0
    %618 = vmatprep.mubr.f32.mxu0 0.0
    %619 = vmatmul.mubr.f32.gmra.mxu0 %v146
    %v620 = vpop.f32.mrf.mxu0
    %v621 = vadd.f32 0.0, %v620
    %v622 = vpop.f32.mrf.mxu0
    %623 = vmatprep.mubr.f32.mxu0 0.0
    %624 = vmatmul.mubr.f32.gmra.mxu0 %v149
    %v625 = vpop.f32.mrf.mxu0
    %v626 = vadd.f32 0.0, %v625
    %v627 = vpop.f32.mrf.mxu0
    %628 = vmatprep.mubr.f32.mxu0 0.0
    %629 = vmatmul.mubr.f32.gmra.mxu0 %v152
    %v630 = vpop.f32.mrf.mxu0
    %v631 = vadd.f32 0.0, %v630
    %v632 = vpop.f32.mrf.mxu0
    %633 = vmatprep.mubr.f32.mxu0 0.0
    %634 = vmatmul.mubr.f32.gmra.mxu0 %v155
    %v635 = vpop.f32.mrf.mxu0
    %v636 = vadd.f32 0.0, %v635
    %v637 = vpop.f32.mrf.mxu0
    %638 = vmatprep.mubr.f32.mxu0 0.0
    %639 = vmatmul.mubr.f32.gmra.mxu0 %v158
    %v640 = vpop.f32.mrf.mxu0
    %v641 = vadd.f32 0.0, %v640
    %v642 = vpop.f32.mrf.mxu0
    %643 = vdwg.mxu0
    %v644 = vmax.f32 %v486, 0.0
    %v645 = vmax.f32 %v491, 0.0
    %v646 = vmax.f32 %v496, 0.0
    %v647 = vmax.f32 %v501, 0.0
    %v648 = vmax.f32 %v506, 0.0
    %v649 = vmax.f32 %v511, 0.0
    %v650 = vmax.f32 %v516, 0.0
    %v651 = vmax.f32 %v521, 0.0
    %v652 = vmax.f32 %v526, 0.0
    %v653 = vmax.f32 %v531, 0.0
    %v654 = vmax.f32 %v536, 0.0
    %v655 = vmax.f32 %v541, 0.0
    %v656 = vmax.f32 %v546, 0.0
    %v657 = vmax.f32 %v551, 0.0
    %v658 = vmax.f32 %v556, 0.0
    %v659 = vmax.f32 %v561, 0.0
    %v660 = vmax.f32 %v566, 0.0
    %v661 = vmax.f32 %v571, 0.0
    %v662 = vmax.f32 %v576, 0.0
    %v663 = vmax.f32 %v581, 0.0
    %v664 = vmax.f32 %v586, 0.0
    %v665 = vmax.f32 %v591, 0.0
    %v666 = vmax.f32 %v596, 0.0
    %v667 = vmax.f32 %v601, 0.0
    %v668 = vmax.f32 %v606, 0.0
    %v669 = vmax.f32 %v611, 0.0
    %v670 = vmax.f32 %v616, 0.0
    %v671 = vmax.f32 %v621, 0.0
    %v672 = vmax.f32 %v626, 0.0
    %v673 = vmax.f32 %v631, 0.0
    %v674 = vmax.f32 %v636, 0.0
    %v675 = vmax.f32 %v641, 0.0
    %s676 = ssub.f32 0.0, %s28
    %v677 = vstv %s676
    %v678 = vmul.f32 %v677, %v644
    %v679 = vmul.f32 %v677, %v645
    %v680 = vmul.f32 %v677, %v646
    %v681 = vmul.f32 %v677, %v647
    %v682 = vmul.f32 %v677, %v648
    %v683 = vmul.f32 %v677, %v649
    %v684 = vmul.f32 %v677, %v650
    %v685 = vmul.f32 %v677, %v651
    %v686 = vmul.f32 %v677, %v652
    %v687 = vmul.f32 %v677, %v653
    %v688 = vmul.f32 %v677, %v654
    %v689 = vmul.f32 %v677, %v655
    %v690 = vmul.f32 %v677, %v656
    %v691 = vmul.f32 %v677, %v657
    %v692 = vmul.f32 %v677, %v658
    %v693 = vmul.f32 %v677, %v659
    %v694 = vmul.f32 %v677, %v660
    %v695 = vmul.f32 %v677, %v661
    %v696 = vmul.f32 %v677, %v662
    %v697 = vmul.f32 %v677, %v663
    %v698 = vmul.f32 %v677, %v664
    %v699 = vmul.f32 %v677, %v665
    %v700 = vmul.f32 %v677, %v666
    %v701 = vmul.f32 %v677, %v667
    %v702 = vmul.f32 %v677, %v668
    %v703 = vmul.f32 %v677, %v669
    %v704 = vmul.f32 %v677, %v670
    %v705 = vmul.f32 %v677, %v671
    %v706 = vmul.f32 %v677, %v672
    %v707 = vmul.f32 %v677, %v673
    %v708 = vmul.f32 %v677, %v674
    %v709 = vmul.f32 %v677, %v675
    %v710 = vmul.f32 %v678, 1.442695
    %v711 = vpow.pop %v710
    %v712 = vmul.f32 %v679, 1.442695
    %v713 = vpow.pop %v712
    %v714 = vmul.f32 %v680, 1.442695
    %v715 = vpow.pop %v714
    %v716 = vmul.f32 %v681, 1.442695
    %v717 = vpow.pop %v716
    %v718 = vmul.f32 %v682, 1.442695
    %v719 = vpow.pop %v718
    %v720 = vmul.f32 %v683, 1.442695
    %v721 = vpow.pop %v720
    %v722 = vmul.f32 %v684, 1.442695
    %v723 = vpow.pop %v722
    %v724 = vmul.f32 %v685, 1.442695
    %v725 = vpow.pop %v724
    %v726 = vmul.f32 %v686, 1.442695
    %v727 = vpow.pop %v726
    %v728 = vmul.f32 %v687, 1.442695
    %v729 = vpow.pop %v728
    %v730 = vmul.f32 %v688, 1.442695
    %v731 = vpow.pop %v730
    %v732 = vmul.f32 %v689, 1.442695
    %v733 = vpow.pop %v732
    %v734 = vmul.f32 %v690, 1.442695
    %v735 = vpow.pop %v734
    %v736 = vmul.f32 %v691, 1.442695
    %v737 = vpow.pop %v736
    %v738 = vmul.f32 %v692, 1.442695
    %v739 = vpow.pop %v738
    %v740 = vmul.f32 %v693, 1.442695
    %v741 = vpow.pop %v740
    %v742 = vmul.f32 %v694, 1.442695
    %v743 = vpow.pop %v742
    %v744 = vmul.f32 %v695, 1.442695
    %v745 = vpow.pop %v744
    %v746 = vmul.f32 %v696, 1.442695
    %v747 = vpow.pop %v746
    %v748 = vmul.f32 %v697, 1.442695
    %v749 = vpow.pop %v748
    %v750 = vmul.f32 %v698, 1.442695
    %v751 = vpow.pop %v750
    %v752 = vmul.f32 %v699, 1.442695
    %v753 = vpow.pop %v752
    %v754 = vmul.f32 %v700, 1.442695
    %v755 = vpow.pop %v754
    %v756 = vmul.f32 %v701, 1.442695
    %v757 = vpow.pop %v756
    %v758 = vmul.f32 %v702, 1.442695
    %v759 = vpow.pop %v758
    %v760 = vmul.f32 %v703, 1.442695
    %v761 = vpow.pop %v760
    %v762 = vmul.f32 %v704, 1.442695
    %v763 = vpow.pop %v762
    %v764 = vmul.f32 %v705, 1.442695
    %v765 = vpow.pop %v764
    %v766 = vmul.f32 %v706, 1.442695
    %v767 = vpow.pop %v766
    %v768 = vmul.f32 %v707, 1.442695
    %v769 = vpow.pop %v768
    %v770 = vmul.f32 %v708, 1.442695
    %v771 = vpow.pop %v770
    %v772 = vmul.f32 %v709, 1.442695
    %v773 = vpow.pop %v772
    %v774 = vmul.f32 %v385, %v711
    %v775 = vmul.f32 %v386, %v713
    %v776 = vmul.f32 %v387, %v715
    %v777 = vmul.f32 %v388, %v717
    %v778 = vmul.f32 %v389, %v719
    %v779 = vmul.f32 %v390, %v721
    %v780 = vmul.f32 %v391, %v723
    %v781 = vmul.f32 %v392, %v725
    %v782 = vmul.f32 %v393, %v727
    %v783 = vmul.f32 %v394, %v729
    %v784 = vmul.f32 %v395, %v731
    %v785 = vmul.f32 %v396, %v733
    %v786 = vmul.f32 %v397, %v735
    %v787 = vmul.f32 %v398, %v737
    %v788 = vmul.f32 %v399, %v739
    %v789 = vmul.f32 %v400, %v741
    %v790 = vmul.f32 %v401, %v743
    %v791 = vmul.f32 %v402, %v745
    %v792 = vmul.f32 %v403, %v747
    %v793 = vmul.f32 %v404, %v749
    %v794 = vmul.f32 %v405, %v751
    %v795 = vmul.f32 %v406, %v753
    %v796 = vmul.f32 %v407, %v755
    %v797 = vmul.f32 %v408, %v757
    %v798 = vmul.f32 %v409, %v759
    %v799 = vmul.f32 %v410, %v761
    %v800 = vmul.f32 %v411, %v763
    %v801 = vmul.f32 %v412, %v765
    %v802 = vmul.f32 %v413, %v767
    %v803 = vmul.f32 %v414, %v769
    %v804 = vmul.f32 %v415, %v771
    %v805 = vmul.f32 %v416, %v773
    %v806 = vld [vmem:[%s4] sm:$0xff]
    %v807 = vld [vmem:[%s4 + $0x8] sm:$0xff]
    %v808 = vld [vmem:[%s4 + $0x10] sm:$0xff]
    %v809 = vld [vmem:[%s4 + $0x18] sm:$0xff]
    %v810 = vld [vmem:[%s4 + $0x20] sm:$0xff]
    %v811 = vld [vmem:[%s4 + $0x28] sm:$0xff]
    %v812 = vld [vmem:[%s4 + $0x30] sm:$0xff]
    %v813 = vld [vmem:[%s4 + $0x38] sm:$0xff]
    %v814 = vld [vmem:[%s4 + $0x40] sm:$0xff]
    %v815 = vld [vmem:[%s4 + $0x48] sm:$0xff]
    %v816 = vld [vmem:[%s4 + $0x50] sm:$0xff]
    %v817 = vld [vmem:[%s4 + $0x58] sm:$0xff]
    %v818 = vld [vmem:[%s4 + $0x60] sm:$0xff]
    %v819 = vld [vmem:[%s4 + $0x68] sm:$0xff]
    %v820 = vld [vmem:[%s4 + $0x70] sm:$0xff]
    %v821 = vld [vmem:[%s4 + $0x78] sm:$0xff]
    %v822 = vld [vmem:[%s4 + $0x80] sm:$0xff]
    %v823 = vld [vmem:[%s4 + $0x88] sm:$0xff]
    %v824 = vld [vmem:[%s4 + $0x90] sm:$0xff]
    %v825 = vld [vmem:[%s4 + $0x98] sm:$0xff]
    %v826 = vld [vmem:[%s4 + $0xa0] sm:$0xff]
    %v827 = vld [vmem:[%s4 + $0xa8] sm:$0xff]
    %v828 = vld [vmem:[%s4 + $0xb0] sm:$0xff]
    %v829 = vld [vmem:[%s4 + $0xb8] sm:$0xff]
    %v830 = vld [vmem:[%s4 + $0xc0] sm:$0xff]
    %v831 = vld [vmem:[%s4 + $0xc8] sm:$0xff]
    %v832 = vld [vmem:[%s4 + $0xd0] sm:$0xff]
    %v833 = vld [vmem:[%s4 + $0xd8] sm:$0xff]
    %v834 = vld [vmem:[%s4 + $0xe0] sm:$0xff]
    %v835 = vld [vmem:[%s4 + $0xe8] sm:$0xff]
    %v836 = vld [vmem:[%s4 + $0xf0] sm:$0xff]
    %v837 = vld [vmem:[%s4 + $0xf8] sm:$0xff]
    %839 = vset.pattern.permute.xlu0 0
    %840 = vperm.xlu0 %839, %v806
    %v841 = vpop.permute.xlu0 %840
    %844 = vset.pattern.permute.xlu0 0
    %845 = vperm.xlu0 %844, %v807
    %v846 = vpop.permute.xlu0 %845
    %849 = vset.pattern.permute.xlu0 0
    %850 = vperm.xlu0 %849, %v808
    %v851 = vpop.permute.xlu0 %850
    %854 = vset.pattern.permute.xlu0 0
    %855 = vperm.xlu0 %854, %v809
    %v856 = vpop.permute.xlu0 %855
    %859 = vset.pattern.permute.xlu0 0
    %860 = vperm.xlu0 %859, %v810
    %v861 = vpop.permute.xlu0 %860
    %864 = vset.pattern.permute.xlu0 0
    %865 = vperm.xlu0 %864, %v811
    %v866 = vpop.permute.xlu0 %865
    %869 = vset.pattern.permute.xlu0 0
    %870 = vperm.xlu0 %869, %v812
    %v871 = vpop.permute.xlu0 %870
    %874 = vset.pattern.permute.xlu0 0
    %875 = vperm.xlu0 %874, %v813
    %v876 = vpop.permute.xlu0 %875
    %879 = vset.pattern.permute.xlu0 0
    %880 = vperm.xlu0 %879, %v814
    %v881 = vpop.permute.xlu0 %880
    %884 = vset.pattern.permute.xlu0 0
    %885 = vperm.xlu0 %884, %v815
    %v886 = vpop.permute.xlu0 %885
    %889 = vset.pattern.permute.xlu0 0
    %890 = vperm.xlu0 %889, %v816
    %v891 = vpop.permute.xlu0 %890
    %894 = vset.pattern.permute.xlu0 0
    %895 = vperm.xlu0 %894, %v817
    %v896 = vpop.permute.xlu0 %895
    %899 = vset.pattern.permute.xlu0 0
    %900 = vperm.xlu0 %899, %v818
    %v901 = vpop.permute.xlu0 %900
    %904 = vset.pattern.permute.xlu0 0
    %905 = vperm.xlu0 %904, %v819
    %v906 = vpop.permute.xlu0 %905
    %909 = vset.pattern.permute.xlu0 0
    %910 = vperm.xlu0 %909, %v820
    %v911 = vpop.permute.xlu0 %910
    %914 = vset.pattern.permute.xlu0 0
    %915 = vperm.xlu0 %914, %v821
    %v916 = vpop.permute.xlu0 %915
    %919 = vset.pattern.permute.xlu0 0
    %920 = vperm.xlu0 %919, %v822
    %v921 = vpop.permute.xlu0 %920
    %924 = vset.pattern.permute.xlu0 0
    %925 = vperm.xlu0 %924, %v823
    %v926 = vpop.permute.xlu0 %925
    %929 = vset.pattern.permute.xlu0 0
    %930 = vperm.xlu0 %929, %v824
    %v931 = vpop.permute.xlu0 %930
    %934 = vset.pattern.permute.xlu0 0
    %935 = vperm.xlu0 %934, %v825
    %v936 = vpop.permute.xlu0 %935
    %939 = vset.pattern.permute.xlu0 0
    %940 = vperm.xlu0 %939, %v826
    %v941 = vpop.permute.xlu0 %940
    %944 = vset.pattern.permute.xlu0 0
    %945 = vperm.xlu0 %944, %v827
    %v946 = vpop.permute.xlu0 %945
    %949 = vset.pattern.permute.xlu0 0
    %950 = vperm.xlu0 %949, %v828
    %v951 = vpop.permute.xlu0 %950
    %954 = vset.pattern.permute.xlu0 0
    %955 = vperm.xlu0 %954, %v829
    %v956 = vpop.permute.xlu0 %955
    %959 = vset.pattern.permute.xlu0 0
    %960 = vperm.xlu0 %959, %v830
    %v961 = vpop.permute.xlu0 %960
    %964 = vset.pattern.permute.xlu0 0
    %965 = vperm.xlu0 %964, %v831
    %v966 = vpop.permute.xlu0 %965
    %969 = vset.pattern.permute.xlu0 0
    %970 = vperm.xlu0 %969, %v832
    %v971 = vpop.permute.xlu0 %970
    %974 = vset.pattern.permute.xlu0 0
    %975 = vperm.xlu0 %974, %v833
    %v976 = vpop.permute.xlu0 %975
    %979 = vset.pattern.permute.xlu0 0
    %980 = vperm.xlu0 %979, %v834
    %v981 = vpop.permute.xlu0 %980
    %984 = vset.pattern.permute.xlu0 0
    %985 = vperm.xlu0 %984, %v835
    %v986 = vpop.permute.xlu0 %985
    %989 = vset.pattern.permute.xlu0 0
    %990 = vperm.xlu0 %989, %v836
    %v991 = vpop.permute.xlu0 %990
    %994 = vset.pattern.permute.xlu0 0
    %995 = vperm.xlu0 %994, %v837
    %v996 = vpop.permute.xlu0 %995
    %v998 = vmul.f32 %v774, %v841
    %v999 = vmul.f32 %v775, %v846
    %v1000 = vmul.f32 %v776, %v851
    %v1001 = vmul.f32 %v777, %v856
    %v1002 = vmul.f32 %v778, %v861
    %v1003 = vmul.f32 %v779, %v866
    %v1004 = vmul.f32 %v780, %v871
    %v1005 = vmul.f32 %v781, %v876
    %v1006 = vmul.f32 %v782, %v881
    %v1007 = vmul.f32 %v783, %v886
    %v1008 = vmul.f32 %v784, %v891
    %v1009 = vmul.f32 %v785, %v896
    %v1010 = vmul.f32 %v786, %v901
    %v1011 = vmul.f32 %v787, %v906
    %v1012 = vmul.f32 %v788, %v911
    %v1013 = vmul.f32 %v789, %v916
    %v1014 = vmul.f32 %v790, %v921
    %v1015 = vmul.f32 %v791, %v926
    %v1016 = vmul.f32 %v792, %v931
    %v1017 = vmul.f32 %v793, %v936
    %v1018 = vmul.f32 %v794, %v941
    %v1019 = vmul.f32 %v795, %v946
    %v1020 = vmul.f32 %v796, %v951
    %v1021 = vmul.f32 %v797, %v956
    %v1022 = vmul.f32 %v798, %v961
    %v1023 = vmul.f32 %v799, %v966
    %v1024 = vmul.f32 %v800, %v971
    %v1025 = vmul.f32 %v801, %v976
    %v1026 = vmul.f32 %v802, %v981
    %v1027 = vmul.f32 %v803, %v986
    %v1028 = vmul.f32 %v804, %v991
    %v1029 = vmul.f32 %v805, %v996
    %1030 = vst [vmem:[#allocation3] sm:$0xff] %v998
    %1031 = vst [vmem:[#allocation3 + $0x8] sm:$0xff] %v999
    %1032 = vst [vmem:[#allocation3 + $0x10] sm:$0xff] %v1000
    %1033 = vst [vmem:[#allocation3 + $0x18] sm:$0xff] %v1001
    %1034 = vst [vmem:[#allocation3 + $0x20] sm:$0xff] %v1002
    %1035 = vst [vmem:[#allocation3 + $0x28] sm:$0xff] %v1003
    %1036 = vst [vmem:[#allocation3 + $0x30] sm:$0xff] %v1004
    %1037 = vst [vmem:[#allocation3 + $0x38] sm:$0xff] %v1005
    %1038 = vst [vmem:[#allocation3 + $0x40] sm:$0xff] %v1006
    %1039 = vst [vmem:[#allocation3 + $0x48] sm:$0xff] %v1007
    %1040 = vst [vmem:[#allocation3 + $0x50] sm:$0xff] %v1008
    %1041 = vst [vmem:[#allocation3 + $0x58] sm:$0xff] %v1009
    %1042 = vst [vmem:[#allocation3 + $0x60] sm:$0xff] %v1010
    %1043 = vst [vmem:[#allocation3 + $0x68] sm:$0xff] %v1011
    %1044 = vst [vmem:[#allocation3 + $0x70] sm:$0xff] %v1012
    %1045 = vst [vmem:[#allocation3 + $0x78] sm:$0xff] %v1013
    %1046 = vst [vmem:[#allocation3 + $0x80] sm:$0xff] %v1014
    %1047 = vst [vmem:[#allocation3 + $0x88] sm:$0xff] %v1015
    %1048 = vst [vmem:[#allocation3 + $0x90] sm:$0xff] %v1016
    %1049 = vst [vmem:[#allocation3 + $0x98] sm:$0xff] %v1017
    %1050 = vst [vmem:[#allocation3 + $0xa0] sm:$0xff] %v1018
    %1051 = vst [vmem:[#allocation3 + $0xa8] sm:$0xff] %v1019
    %1052 = vst [vmem:[#allocation3 + $0xb0] sm:$0xff] %v1020
    %1053 = vst [vmem:[#allocation3 + $0xb8] sm:$0xff] %v1021
    %1054 = vst [vmem:[#allocation3 + $0xc0] sm:$0xff] %v1022
    %1055 = vst [vmem:[#allocation3 + $0xc8] sm:$0xff] %v1023
    %1056 = vst [vmem:[#allocation3 + $0xd0] sm:$0xff] %v1024
    %1057 = vst [vmem:[#allocation3 + $0xd8] sm:$0xff] %v1025
    %1058 = vst [vmem:[#allocation3 + $0xe0] sm:$0xff] %v1026
    %1059 = vst [vmem:[#allocation3 + $0xe8] sm:$0xff] %v1027
    %1060 = vst [vmem:[#allocation3 + $0xf0] sm:$0xff] %v1028
    %1061 = vst [vmem:[#allocation3 + $0xf8] sm:$0xff] %v1029
    %v1062 = vmul.f32 %v711, %v711
    %v1063 = vmul.f32 %v713, %v713
    %v1064 = vmul.f32 %v715, %v715
    %v1065 = vmul.f32 %v717, %v717
    %v1066 = vmul.f32 %v719, %v719
    %v1067 = vmul.f32 %v721, %v721
    %v1068 = vmul.f32 %v723, %v723
    %v1069 = vmul.f32 %v725, %v725
    %v1070 = vmul.f32 %v727, %v727
    %v1071 = vmul.f32 %v729, %v729
    %v1072 = vmul.f32 %v731, %v731
    %v1073 = vmul.f32 %v733, %v733
    %v1074 = vmul.f32 %v735, %v735
    %v1075 = vmul.f32 %v737, %v737
    %v1076 = vmul.f32 %v739, %v739
    %v1077 = vmul.f32 %v741, %v741
    %v1078 = vmul.f32 %v743, %v743
    %v1079 = vmul.f32 %v745, %v745
    %v1080 = vmul.f32 %v747, %v747
    %v1081 = vmul.f32 %v749, %v749
    %v1082 = vmul.f32 %v751, %v751
    %v1083 = vmul.f32 %v753, %v753
    %v1084 = vmul.f32 %v755, %v755
    %v1085 = vmul.f32 %v757, %v757
    %v1086 = vmul.f32 %v759, %v759
    %v1087 = vmul.f32 %v761, %v761
    %v1088 = vmul.f32 %v763, %v763
    %v1089 = vmul.f32 %v765, %v765
    %v1090 = vmul.f32 %v767, %v767
    %v1091 = vmul.f32 %v769, %v769
    %v1092 = vmul.f32 %v771, %v771
    %v1093 = vmul.f32 %v773, %v773
    %v1094 = vmul.f32 %v644, %v1062
    %v1095 = vmul.f32 %v645, %v1063
    %v1096 = vmul.f32 %v646, %v1064
    %v1097 = vmul.f32 %v647, %v1065
    %v1098 = vmul.f32 %v648, %v1066
    %v1099 = vmul.f32 %v649, %v1067
    %v1100 = vmul.f32 %v650, %v1068
    %v1101 = vmul.f32 %v651, %v1069
    %v1102 = vmul.f32 %v652, %v1070
    %v1103 = vmul.f32 %v653, %v1071
    %v1104 = vmul.f32 %v654, %v1072
    %v1105 = vmul.f32 %v655, %v1073
    %v1106 = vmul.f32 %v656, %v1074
    %v1107 = vmul.f32 %v657, %v1075
    %v1108 = vmul.f32 %v658, %v1076
    %v1109 = vmul.f32 %v659, %v1077
    %v1110 = vmul.f32 %v660, %v1078
    %v1111 = vmul.f32 %v661, %v1079
    %v1112 = vmul.f32 %v662, %v1080
    %v1113 = vmul.f32 %v663, %v1081
    %v1114 = vmul.f32 %v664, %v1082
    %v1115 = vmul.f32 %v665, %v1083
    %v1116 = vmul.f32 %v666, %v1084
    %v1117 = vmul.f32 %v667, %v1085
    %v1118 = vmul.f32 %v668, %v1086
    %v1119 = vmul.f32 %v669, %v1087
    %v1120 = vmul.f32 %v670, %v1088
    %v1121 = vmul.f32 %v671, %v1089
    %v1122 = vmul.f32 %v672, %v1090
    %v1123 = vmul.f32 %v673, %v1091
    %v1124 = vmul.f32 %v674, %v1092
    %v1125 = vmul.f32 %v675, %v1093
    %v1126 = vld [vmem:[%s5] sm:$0xff]
    %v1127 = vld [vmem:[%s5 + $0x8] sm:$0xff]
    %v1128 = vld [vmem:[%s5 + $0x10] sm:$0xff]
    %v1129 = vld [vmem:[%s5 + $0x18] sm:$0xff]
    %v1130 = vld [vmem:[%s5 + $0x20] sm:$0xff]
    %v1131 = vld [vmem:[%s5 + $0x28] sm:$0xff]
    %v1132 = vld [vmem:[%s5 + $0x30] sm:$0xff]
    %v1133 = vld [vmem:[%s5 + $0x38] sm:$0xff]
    %v1134 = vld [vmem:[%s5 + $0x40] sm:$0xff]
    %v1135 = vld [vmem:[%s5 + $0x48] sm:$0xff]
    %v1136 = vld [vmem:[%s5 + $0x50] sm:$0xff]
    %v1137 = vld [vmem:[%s5 + $0x58] sm:$0xff]
    %v1138 = vld [vmem:[%s5 + $0x60] sm:$0xff]
    %v1139 = vld [vmem:[%s5 + $0x68] sm:$0xff]
    %v1140 = vld [vmem:[%s5 + $0x70] sm:$0xff]
    %v1141 = vld [vmem:[%s5 + $0x78] sm:$0xff]
    %v1142 = vld [vmem:[%s5 + $0x80] sm:$0xff]
    %v1143 = vld [vmem:[%s5 + $0x88] sm:$0xff]
    %v1144 = vld [vmem:[%s5 + $0x90] sm:$0xff]
    %v1145 = vld [vmem:[%s5 + $0x98] sm:$0xff]
    %v1146 = vld [vmem:[%s5 + $0xa0] sm:$0xff]
    %v1147 = vld [vmem:[%s5 + $0xa8] sm:$0xff]
    %v1148 = vld [vmem:[%s5 + $0xb0] sm:$0xff]
    %v1149 = vld [vmem:[%s5 + $0xb8] sm:$0xff]
    %v1150 = vld [vmem:[%s5 + $0xc0] sm:$0xff]
    %v1151 = vld [vmem:[%s5 + $0xc8] sm:$0xff]
    %v1152 = vld [vmem:[%s5 + $0xd0] sm:$0xff]
    %v1153 = vld [vmem:[%s5 + $0xd8] sm:$0xff]
    %v1154 = vld [vmem:[%s5 + $0xe0] sm:$0xff]
    %v1155 = vld [vmem:[%s5 + $0xe8] sm:$0xff]
    %v1156 = vld [vmem:[%s5 + $0xf0] sm:$0xff]
    %v1157 = vld [vmem:[%s5 + $0xf8] sm:$0xff]
    %1159 = vset.pattern.permute.xlu0 0
    %1160 = vperm.xlu0 %1159, %v1126
    %v1161 = vpop.permute.xlu0 %1160
    %1164 = vset.pattern.permute.xlu0 0
    %1165 = vperm.xlu0 %1164, %v1127
    %v1166 = vpop.permute.xlu0 %1165
    %1169 = vset.pattern.permute.xlu0 0
    %1170 = vperm.xlu0 %1169, %v1128
    %v1171 = vpop.permute.xlu0 %1170
    %1174 = vset.pattern.permute.xlu0 0
    %1175 = vperm.xlu0 %1174, %v1129
    %v1176 = vpop.permute.xlu0 %1175
    %1179 = vset.pattern.permute.xlu0 0
    %1180 = vperm.xlu0 %1179, %v1130
    %v1181 = vpop.permute.xlu0 %1180
    %1184 = vset.pattern.permute.xlu0 0
    %1185 = vperm.xlu0 %1184, %v1131
    %v1186 = vpop.permute.xlu0 %1185
    %1189 = vset.pattern.permute.xlu0 0
    %1190 = vperm.xlu0 %1189, %v1132
    %v1191 = vpop.permute.xlu0 %1190
    %1194 = vset.pattern.permute.xlu0 0
    %1195 = vperm.xlu0 %1194, %v1133
    %v1196 = vpop.permute.xlu0 %1195
    %1199 = vset.pattern.permute.xlu0 0
    %1200 = vperm.xlu0 %1199, %v1134
    %v1201 = vpop.permute.xlu0 %1200
    %1204 = vset.pattern.permute.xlu0 0
    %1205 = vperm.xlu0 %1204, %v1135
    %v1206 = vpop.permute.xlu0 %1205
    %1209 = vset.pattern.permute.xlu0 0
    %1210 = vperm.xlu0 %1209, %v1136
    %v1211 = vpop.permute.xlu0 %1210
    %1214 = vset.pattern.permute.xlu0 0
    %1215 = vperm.xlu0 %1214, %v1137
    %v1216 = vpop.permute.xlu0 %1215
    %1219 = vset.pattern.permute.xlu0 0
    %1220 = vperm.xlu0 %1219, %v1138
    %v1221 = vpop.permute.xlu0 %1220
    %1224 = vset.pattern.permute.xlu0 0
    %1225 = vperm.xlu0 %1224, %v1139
    %v1226 = vpop.permute.xlu0 %1225
    %1229 = vset.pattern.permute.xlu0 0
    %1230 = vperm.xlu0 %1229, %v1140
    %v1231 = vpop.permute.xlu0 %1230
    %1234 = vset.pattern.permute.xlu0 0
    %1235 = vperm.xlu0 %1234, %v1141
    %v1236 = vpop.permute.xlu0 %1235
    %1239 = vset.pattern.permute.xlu0 0
    %1240 = vperm.xlu0 %1239, %v1142
    %v1241 = vpop.permute.xlu0 %1240
    %1244 = vset.pattern.permute.xlu0 0
    %1245 = vperm.xlu0 %1244, %v1143
    %v1246 = vpop.permute.xlu0 %1245
    %1249 = vset.pattern.permute.xlu0 0
    %1250 = vperm.xlu0 %1249, %v1144
    %v1251 = vpop.permute.xlu0 %1250
    %1254 = vset.pattern.permute.xlu0 0
    %1255 = vperm.xlu0 %1254, %v1145
    %v1256 = vpop.permute.xlu0 %1255
    %1259 = vset.pattern.permute.xlu0 0
    %1260 = vperm.xlu0 %1259, %v1146
    %v1261 = vpop.permute.xlu0 %1260
    %1264 = vset.pattern.permute.xlu0 0
    %1265 = vperm.xlu0 %1264, %v1147
    %v1266 = vpop.permute.xlu0 %1265
    %1269 = vset.pattern.permute.xlu0 0
    %1270 = vperm.xlu0 %1269, %v1148
    %v1271 = vpop.permute.xlu0 %1270
    %1274 = vset.pattern.permute.xlu0 0
    %1275 = vperm.xlu0 %1274, %v1149
    %v1276 = vpop.permute.xlu0 %1275
    %1279 = vset.pattern.permute.xlu0 0
    %1280 = vperm.xlu0 %1279, %v1150
    %v1281 = vpop.permute.xlu0 %1280
    %1284 = vset.pattern.permute.xlu0 0
    %1285 = vperm.xlu0 %1284, %v1151
    %v1286 = vpop.permute.xlu0 %1285
    %1289 = vset.pattern.permute.xlu0 0
    %1290 = vperm.xlu0 %1289, %v1152
    %v1291 = vpop.permute.xlu0 %1290
    %1294 = vset.pattern.permute.xlu0 0
    %1295 = vperm.xlu0 %1294, %v1153
    %v1296 = vpop.permute.xlu0 %1295
    %1299 = vset.pattern.permute.xlu0 0
    %1300 = vperm.xlu0 %1299, %v1154
    %v1301 = vpop.permute.xlu0 %1300
    %1304 = vset.pattern.permute.xlu0 0
    %1305 = vperm.xlu0 %1304, %v1155
    %v1306 = vpop.permute.xlu0 %1305
    %1309 = vset.pattern.permute.xlu0 0
    %1310 = vperm.xlu0 %1309, %v1156
    %v1311 = vpop.permute.xlu0 %1310
    %1314 = vset.pattern.permute.xlu0 0
    %1315 = vperm.xlu0 %1314, %v1157
    %v1316 = vpop.permute.xlu0 %1315
    %v1318 = vmul.f32 %v1094, %v1161
    %v1319 = vmul.f32 %v1095, %v1166
    %v1320 = vmul.f32 %v1096, %v1171
    %v1321 = vmul.f32 %v1097, %v1176
    %v1322 = vmul.f32 %v1098, %v1181
    %v1323 = vmul.f32 %v1099, %v1186
    %v1324 = vmul.f32 %v1100, %v1191
    %v1325 = vmul.f32 %v1101, %v1196
    %v1326 = vmul.f32 %v1102, %v1201
    %v1327 = vmul.f32 %v1103, %v1206
    %v1328 = vmul.f32 %v1104, %v1211
    %v1329 = vmul.f32 %v1105, %v1216
    %v1330 = vmul.f32 %v1106, %v1221
    %v1331 = vmul.f32 %v1107, %v1226
    %v1332 = vmul.f32 %v1108, %v1231
    %v1333 = vmul.f32 %v1109, %v1236
    %v1334 = vmul.f32 %v1110, %v1241
    %v1335 = vmul.f32 %v1111, %v1246
    %v1336 = vmul.f32 %v1112, %v1251
    %v1337 = vmul.f32 %v1113, %v1256
    %v1338 = vmul.f32 %v1114, %v1261
    %v1339 = vmul.f32 %v1115, %v1266
    %v1340 = vmul.f32 %v1116, %v1271
    %v1341 = vmul.f32 %v1117, %v1276
    %v1342 = vmul.f32 %v1118, %v1281
    %v1343 = vmul.f32 %v1119, %v1286
    %v1344 = vmul.f32 %v1120, %v1291
    %v1345 = vmul.f32 %v1121, %v1296
    %v1346 = vmul.f32 %v1122, %v1301
    %v1347 = vmul.f32 %v1123, %v1306
    %v1348 = vmul.f32 %v1124, %v1311
    %v1349 = vmul.f32 %v1125, %v1316
    %1350 = vst [vmem:[#allocation5] sm:$0xff] %v1318
    %1351 = vst [vmem:[#allocation5 + $0x8] sm:$0xff] %v1319
    %1352 = vst [vmem:[#allocation5 + $0x10] sm:$0xff] %v1320
    %1353 = vst [vmem:[#allocation5 + $0x18] sm:$0xff] %v1321
    %1354 = vst [vmem:[#allocation5 + $0x20] sm:$0xff] %v1322
    %1355 = vst [vmem:[#allocation5 + $0x28] sm:$0xff] %v1323
    %1356 = vst [vmem:[#allocation5 + $0x30] sm:$0xff] %v1324
    %1357 = vst [vmem:[#allocation5 + $0x38] sm:$0xff] %v1325
    %1358 = vst [vmem:[#allocation5 + $0x40] sm:$0xff] %v1326
    %1359 = vst [vmem:[#allocation5 + $0x48] sm:$0xff] %v1327
    %1360 = vst [vmem:[#allocation5 + $0x50] sm:$0xff] %v1328
    %1361 = vst [vmem:[#allocation5 + $0x58] sm:$0xff] %v1329
    %1362 = vst [vmem:[#allocation5 + $0x60] sm:$0xff] %v1330
    %1363 = vst [vmem:[#allocation5 + $0x68] sm:$0xff] %v1331
    %1364 = vst [vmem:[#allocation5 + $0x70] sm:$0xff] %v1332
    %1365 = vst [vmem:[#allocation5 + $0x78] sm:$0xff] %v1333
    %1366 = vst [vmem:[#allocation5 + $0x80] sm:$0xff] %v1334
    %1367 = vst [vmem:[#allocation5 + $0x88] sm:$0xff] %v1335
    %1368 = vst [vmem:[#allocation5 + $0x90] sm:$0xff] %v1336
    %1369 = vst [vmem:[#allocation5 + $0x98] sm:$0xff] %v1337
    %1370 = vst [vmem:[#allocation5 + $0xa0] sm:$0xff] %v1338
    %1371 = vst [vmem:[#allocation5 + $0xa8] sm:$0xff] %v1339
    %1372 = vst [vmem:[#allocation5 + $0xb0] sm:$0xff] %v1340
    %1373 = vst [vmem:[#allocation5 + $0xb8] sm:$0xff] %v1341
    %1374 = vst [vmem:[#allocation5 + $0xc0] sm:$0xff] %v1342
    %1375 = vst [vmem:[#allocation5 + $0xc8] sm:$0xff] %v1343
    %1376 = vst [vmem:[#allocation5 + $0xd0] sm:$0xff] %v1344
    %1377 = vst [vmem:[#allocation5 + $0xd8] sm:$0xff] %v1345
    %1378 = vst [vmem:[#allocation5 + $0xe0] sm:$0xff] %v1346
    %1379 = vst [vmem:[#allocation5 + $0xe8] sm:$0xff] %v1347
    %1380 = vst [vmem:[#allocation5 + $0xf0] sm:$0xff] %v1348
    %1381 = vst [vmem:[#allocation5 + $0xf8] sm:$0xff] %v1349
    // Predicated region
    $region26: #{tpu_custom_call.1} parent=1 // pred_check
      _
    $region27: #{tpu_custom_call.1} parent=1 // pred_check_branch
      %1383 = sbr.rel (0) target = $region29
    $region28: #{tpu_custom_call.1} parent=1 // pred_region
      %s1385 = ssub.s32 4096, 4096
      %1386 = vsyncadd [#allocation4], %s1385
      %s1387 = sshll.u32 [#allocation3], 4
      %s1388 = int_to_ptr.vmem [resolvable:$true] %s1387
      %1393 = dma.vmem_to_hbm [thread:$0]  %s1388, 4096, %s6, [#allocation4], 128, 128, 8
    $region29: #{tpu_custom_call.1} parent=1 // pred_fallthru
      _
    // Predicated region
    $region30: #{tpu_custom_call.1} parent=1 // pred_check
      _
    $region31: #{tpu_custom_call.1} parent=1 // pred_check_branch
      %1395 = sbr.rel (0) target = $region33
    $region32: #{tpu_custom_call.1} parent=1 // pred_region
      %s1397 = ssub.s32 4096, 4096
      %1398 = vsyncadd [#allocation6], %s1397
      %s1399 = sshll.u32 [#allocation5], 4
      %s1400 = int_to_ptr.vmem [resolvable:$true] %s1399
      %1405 = dma.vmem_to_hbm [thread:$0]  %s1400, 4096, %s7, [#allocation6], 128, 128, 8
    $region33: #{tpu_custom_call.1} parent=1 // pred_fallthru
      _
    // Predicated region
    $region34: #{tpu_custom_call.1} parent=1 // pred_check
      _
    $region35: #{tpu_custom_call.1} parent=1 // pred_check_branch
      %1407 = sbr.rel (0) target = $region37
    $region36: #{tpu_custom_call.1} parent=1 // pred_region
      %1408 = dma.done [#allocation4], 4096
    $region37: #{tpu_custom_call.1} parent=1 // pred_fallthru
      _
    // Predicated region
    $region38: #{tpu_custom_call.1} parent=1 // pred_check
      _
    $region39: #{tpu_custom_call.1} parent=1 // pred_check_branch
      %1410 = sbr.rel (0) target = $region41
    $region40: #{tpu_custom_call.1} parent=1 // pred_region
      %1411 = dma.done [#allocation6], 4096
    $region41: #{tpu_custom_call.1} parent=1 // pred_fallthru
      _
    %1412 = vsyncpa [#allocation4], 1
    %1413 = vsyncpa [#allocation6], 1

</llo_original>
